<compile_context>
chip_gen: v7x
topology: tpu7x:2x2x1
jax: 0.10.0
libtpu: 0.0.40
codegen_flags: <defaults>
</compile_context>

<pallas_src>
import jax
import jax.numpy as jnp
import numpy as np
from jax.experimental import pallas as pl
from jax.experimental.pallas import tpu as pltpu


def _decoder_kernel(x_ref, w_ref, o_ref):
    """One MXU pass per batch tile.

    x_ref : VMEM (TBr, pack*K)        -- lane-dense, row-packed activation tile
    w_ref : VMEM (pack*K, pack*E)     -- block-diag, digit-weight-folded weights (resident)
    o_ref : VMEM (TBr, pack*E) f32    -- lane-dense output tile (pack*E == 128)
    """
    o_ref[...] = jnp.dot(x_ref[...], w_ref[...],
                         preferred_element_type=jnp.float32).astype(o_ref.dtype)


def _round_up(x, m):
    return ((x + m - 1) // m) * m


def simple_decoder_forward(input_c, weights_dea, digit_weights, *,
                           tb=8192, use_bf16=False):
    """SimpleDecoder forward.

    input_c      : (B, D, A) f32
    weights_dea  : (D, E, A) f32  (stacked per-digit PyTorch Linear weights, no bias)
    digit_weights: (D,)      f32
    tb           : target batch rows per grid step (HBM-bound => big tiles)
    use_bf16     : cast activations/weights to bf16 (f32 accumulation) to halve
                   HBM traffic (tolerance-exact only)
    returns      : (B, E)    f32
    """
    B, D, A = input_c.shape
    E = weights_dea.shape[1]
    K = D * A

    # Fold digit weights into the weight slab (exact identity:
    # w_d * (x @ W_d^T) == x @ (w_d * W_d)^T) and flatten the D per-digit matmuls
    # into one K = D*A contraction.  Note: changes accumulation order vs the
    # PyTorch per-digit loop -> tolerance-exact, not bit-exact.
    w_ke = (digit_weights[:, None, None]
            * jnp.transpose(weights_dea, (0, 2, 1))).reshape(K, E)

    # Lane-dense activation slab: contiguity-preserving reshape (no data movement).
    x_bk = input_c.reshape(B, K)

    # ---- lane-dense output packing --------------------------------------------
    pack = 128 // E if (E < 128 and 128 % E == 0) else 1
    Bp = _round_up(B, pack)
    if Bp != B:
        # Tiny pad (< pack rows) only so the row-packing divides evenly; padded
        # rows never reach valid output rows (sliced off below).
        x_bk = jnp.pad(x_bk, ((0, Bp - B), (0, 0)))
    Br = Bp // pack                       # rows of the packed layout
    Kp, Ep = pack * K, pack * E           # 512, 128 for the spec shapes

    x_pk = x_bk.reshape(Br, Kp)                                   # free reshape
    w_blk = jnp.kron(jnp.eye(pack, dtype=w_ke.dtype), w_ke)       # (Kp, Ep)

    if use_bf16:
        x_pk = x_pk.astype(jnp.bfloat16)
        w_blk = w_blk.astype(jnp.bfloat16)

    # ---- batch tiling -----------------------------------------------------------
    # Big tiles (per-step pipeline overhead ~0.35us dominates small tiles), but keep
    # >= 2 "parallel" grid steps when the batch is large enough so both v7x
    # TensorCores (and their HBM bandwidth) are used.  At the default cap
    # (TBr = 2048 packed rows), double-buffered x+out tiles are ~10 MiB, safely
    # under the 16 MiB v5e default scoped-VMEM limit.
    tbr_cap = max(8, tb // pack)
    if Br <= tbr_cap:
        if Br >= 16:
            TBr = min(tbr_cap, _round_up(pl.cdiv(Br, 2), 8))   # >= 2 steps, 8-aligned
        else:
            TBr = Br                                           # single full-extent block
    else:
        TBr = tbr_cap
    grid = (pl.cdiv(Br, TBr),)            # ragged last block: OOB rows are masked
                                          # on writeback (garbage never lands in
                                          # valid output rows)

    itemsize = 2 if use_bf16 else 4
    cost = pl.CostEstimate(
        flops=2 * B * K * E,
        bytes_accessed=itemsize * (Bp * K + Kp * Ep) + 4 * Bp * E,
        transcendentals=0)

    out = pl.pallas_call(
        _decoder_kernel,
        out_shape=jax.ShapeDtypeStruct((Br, Ep), jnp.float32),
        grid=grid,
        in_specs=[
            pl.BlockSpec((TBr, Kp), lambda i: (i, 0)),   # activation tile per step
            pl.BlockSpec((Kp, Ep), lambda i: (0, 0)),    # weight slab, resident
        ],
        out_specs=pl.BlockSpec((TBr, Ep), lambda i: (i, 0)),
        compiler_params=pltpu.CompilerParams(
            dimension_semantics=("parallel",)),          # megacore split on v7x
        cost_estimate=cost,
    )(x_pk, w_blk)

    # TODO(synk): if this decoder is one stage of a larger model, fuse this GEMM
    # into the adjacent Pallas stage to remove the standalone launch entirely.
    out = out.reshape(Bp, E)              # free, contiguous un-packing
    return out if Bp == B else out[:B]


if __name__ == "__main__":
    n_digits = 8    # D
    n_ary = 16      # A (in_features of each Linear)
    n_dim_emb = 32  # E (out_features of each Linear)

    key = jax.random.PRNGKey(0)
    k_in, k_w, k_in2, k_in3 = jax.random.split(key, 4)

    # Per-digit PyTorch Linear weights, stacked: (D, E, A).
    weights_pt = jax.random.normal(
        k_w, (n_digits, n_dim_emb, n_ary), dtype=jnp.float32) * 0.1

    # Module default is lambda d: 1.0; use a nontrivial function so the
    # digit-weight folding is actually exercised numerically.
    digit_weight_function = lambda d: 1.0 / d
    digit_weights = jnp.asarray(
        [digit_weight_function(d + 1) for d in range(n_digits)],
        dtype=jnp.float32)

    def reference(c):
        # Pure-JAX reference matching the PyTorch forward exactly.
        return jnp.sum(
            digit_weights[None, :, None]
            * jnp.einsum("bda,dea->bde", c, weights_pt),
            axis=1)

    # 1) Small spec-consistent shape (B=2): single block, tiny pack-pad path.
    B = 2
    input_c = jax.random.normal(k_in, (B, n_digits, n_ary), dtype=jnp.float32)
    out = jax.block_until_ready(
        simple_decoder_forward(input_c, weights_pt, digit_weights))
    np.testing.assert_allclose(np.asarray(out), np.asarray(reference(input_c)),
                               rtol=1e-5, atol=1e-5)

    # 2) Non-multiple batch: exercises the ragged cdiv grid (masked last block)
    #    and the < pack-row pad.
    B2 = 385
    input_c2 = jax.random.normal(k_in2, (B2, n_digits, n_ary), dtype=jnp.float32)
    out2 = jax.block_until_ready(
        simple_decoder_forward(input_c2, weights_pt, digit_weights))
    np.testing.assert_allclose(np.asarray(out2), np.asarray(reference(input_c2)),
                               rtol=1e-5, atol=1e-5)

    # 3) Clean multi-step path (no pad) + optional bf16 traffic reduction.
    B3 = 512
    input_c3 = jax.random.normal(k_in3, (B3, n_digits, n_ary), dtype=jnp.float32)
    out3 = jax.block_until_ready(
        simple_decoder_forward(input_c3, weights_pt, digit_weights))
    np.testing.assert_allclose(np.asarray(out3), np.asarray(reference(input_c3)),
                               rtol=1e-5, atol=1e-5)
    out3_bf16 = jax.block_until_ready(
        simple_decoder_forward(input_c3, weights_pt, digit_weights, use_bf16=True))
    np.testing.assert_allclose(np.asarray(out3_bf16), np.asarray(reference(input_c3)),
                               rtol=2e-2, atol=2e-2)

    print("KERNEL_OK")
</pallas_src>

<mosaic_0001>
module attributes {stable_mosaic.version = 11 : i64} {
  func.func @_decoder_kernel(%arg0: i32, %arg1: memref<1x512xf32, #tpu.memory_space<vmem>>, %arg2: memref<512x128xf32, #tpu.memory_space<vmem>>, %arg3: memref<1x128xf32, #tpu.memory_space<vmem>>) attributes {dimension_semantics = [#tpu.dimension_semantics<parallel>], iteration_bounds = array<i64: 1>, scalar_prefetch = 0 : i64, scratch_operands = 0 : i64, tpu.core_type = #tpu.core_type<tc>, window_params = [{transform_indices = @transform_0, window_bounds = array<i64: 1, 512>}, {pipeline_mode = #tpu.pipeline_mode<synchronous>, transform_indices = @transform_1, window_bounds = array<i64: 512, 128>}, {transform_indices = @transform_2, window_bounds = array<i64: 1, 128>}]} {
    %c0 = arith.constant 0 : index
    %c0_0 = arith.constant 0 : index
    %0 = vector.load %arg1[%c0, %c0_0] : memref<1x512xf32, #tpu.memory_space<vmem>>, vector<1x512xf32>
    %c0_1 = arith.constant 0 : index
    %c0_2 = arith.constant 0 : index
    %1 = vector.load %arg2[%c0_1, %c0_2] : memref<512x128xf32, #tpu.memory_space<vmem>>, vector<512x128xf32>
    %cst = arith.constant dense<0.000000e+00> : vector<1x128xf32>
    %2 = tpu.matmul %0, %1, %cst {dimension_numbers = #tpu.dot_dimension_numbers<[1], [0], [0], [1], [0, 0, 1, 1], [], []>} : vector<1x512xf32>, vector<512x128xf32>, vector<1x128xf32> -> vector<1x128xf32>
    %c0_3 = arith.constant 0 : index
    %c0_4 = arith.constant 0 : index
    %3 = vector.load %arg3[%c0_3, %c0_4] : memref<1x128xf32, #tpu.memory_space<vmem>>, vector<1x128xf32>
    tpu.vector_store %arg3[%c0_3, %c0_4], %2 {strides = array<i32>} : memref<1x128xf32, #tpu.memory_space<vmem>>, vector<1x128xf32>,
    return
  }
  func.func @transform_0(%arg0: i32) -> (i32, i32) {
    %c0_i32 = arith.constant 0 : i32
    %c0_i32_0 = arith.constant 0 : i32
    return %arg0, %c0_i32 : i32, i32
  }
  func.func @transform_1(%arg0: i32) -> (i32, i32) {
    %c0_i32 = arith.constant 0 : i32
    %c0_i32_0 = arith.constant 0 : i32
    %c0_i32_1 = arith.constant 0 : i32
    return %c0_i32, %c0_i32_0 : i32, i32
  }
  func.func @transform_2(%arg0: i32) -> (i32, i32) {
    %c0_i32 = arith.constant 0 : i32
    %c0_i32_0 = arith.constant 0 : i32
    return %arg0, %c0_i32 : i32, i32
  }
}

</mosaic_0001>

<llo_original>
// kernel: tpu_custom_call.1
$region0: #{tpu_custom_call.1}
  #allocation0 [shape = 'u32[]', space=smem, size = 0x4, offset = 0x4, fixed_abs, tag = 'smem constant byte address 0x4 - core index']
  #allocation1 [shape = 'u32[144,128]{1,0:T(1,128)}', space=vmem, size = 0x12000, scoped, tag = 'internal scratch']
  %s0 = inlined_call_operand.hbm [shape: f32[1,512], index: 0, kind: input, shape index: {}]
  %s1 = inlined_call_operand.hbm [shape: f32[512,128], index: 1, kind: input, shape index: {}]
  %s2 = inlined_call_operand.hbm [shape: f32[1,128], index: 2, kind: output, shape index: {}]
  %s3 = sld [smem:[#allocation0]]
  $region26: #{tpu_custom_call.1} parent=0
    _
  %s5 = ssub.s32 1, %s3
  %s6 = scalar_select 0, %s5, %s3
  $region1: #{tpu_custom_call.1} parent=0
    #allocation2 [shape = 'u8[2048]{0}', space=vmem, size = 0x800, scoped, tag = 'input window, operand 0, single buffered']
    #allocation3 [shape = 's32[1]{0}', space=sflag, size = 0x4, scoped, tag = 'scoped memory for tpu_custom_call.1']
    #allocation4 [shape = 's32[1]{0}', space=sflag, size = 0x4, scoped, tag = 'scoped memory for tpu_custom_call.1']
    #allocation5 [shape = 'u8[262144]{0}', space=vmem, size = 0x40000, scoped, tag = 'input window, operand 1, single buffered']
    #allocation6 [shape = 's32[1]{0}', space=sflag, size = 0x4, scoped, tag = 'scoped memory for tpu_custom_call.1']
    #allocation7 [shape = 'u8[512]{0}', space=vmem, size = 0x400, scoped, tag = 'output window, operand 0, single buffered']
    %7 = vsyncpa [#allocation3], 0
    %8 = vsyncpa [#allocation6], 0
    %9 = vsyncpa [#allocation4], 0
    // Predicated region
    $region2: #{tpu_custom_call.1} parent=1 // pred_check
      _
    $region3: #{tpu_custom_call.1} parent=1 // pred_check_branch
      %11 = sbr.rel (0) target = $region5
    $region4: #{tpu_custom_call.1} parent=1 // pred_region
      %s13 = ssub.s32 64, 64
      %14 = vsyncadd [#allocation3], %s13
      %s16 = sshll.u32 [#allocation2], 4
      %s17 = int_to_ptr.vmem [resolvable:$true] %s16
      %19 = dma.hbm_to_vmem [thread:$0]  %s0, 64, %s17, [#allocation3]
    $region5: #{tpu_custom_call.1} parent=1 // pred_fallthru
      _
    // Predicated region
    $region6: #{tpu_custom_call.1} parent=1 // pred_check
      _
    $region7: #{tpu_custom_call.1} parent=1 // pred_check_branch
      %21 = sbr.rel (0) target = $region9
    $region8: #{tpu_custom_call.1} parent=1 // pred_region
      %s23 = ssub.s32 8192, 8192
      %24 = vsyncadd [#allocation6], %s23
      %s25 = sshll.u32 [#allocation5], 4
      %s26 = int_to_ptr.vmem [resolvable:$true] %s25
      %31 = dma.hbm_to_vmem [thread:$0]  %s1, 8192, %s26, [#allocation6], 128, 128, 8
    $region9: #{tpu_custom_call.1} parent=1 // pred_fallthru
      _
    // Predicated region
    $region10: #{tpu_custom_call.1} parent=1 // pred_check
      _
    $region11: #{tpu_custom_call.1} parent=1 // pred_check_branch
      %33 = sbr.rel (0) target = $region13
    $region12: #{tpu_custom_call.1} parent=1 // pred_region
      %34 = dma.done [#allocation3], 64
    $region13: #{tpu_custom_call.1} parent=1 // pred_fallthru
      _
    // Predicated region
    $region14: #{tpu_custom_call.1} parent=1 // pred_check
      _
    $region15: #{tpu_custom_call.1} parent=1 // pred_check_branch
      %36 = sbr.rel (0) target = $region17
    $region16: #{tpu_custom_call.1} parent=1 // pred_region
      %37 = dma.done [#allocation6], 8192
    $region17: #{tpu_custom_call.1} parent=1 // pred_fallthru
      _
    %v38 = vld [vmem:[#allocation2] sm:$0xf]
    %v39 = vld [vmem:[#allocation5] sm:$0xff]
    %v40 = vld [vmem:[#allocation5 + $0x8] sm:$0xff]
    %v41 = vld [vmem:[#allocation5 + $0x10] sm:$0xff]
    %v42 = vld [vmem:[#allocation5 + $0x18] sm:$0xff]
    %v43 = vld [vmem:[#allocation5 + $0x20] sm:$0xff]
    %v44 = vld [vmem:[#allocation5 + $0x28] sm:$0xff]
    %v45 = vld [vmem:[#allocation5 + $0x30] sm:$0xff]
    %v46 = vld [vmem:[#allocation5 + $0x38] sm:$0xff]
    %v47 = vld [vmem:[#allocation5 + $0x40] sm:$0xff]
    %v48 = vld [vmem:[#allocation5 + $0x48] sm:$0xff]
    %v49 = vld [vmem:[#allocation5 + $0x50] sm:$0xff]
    %v50 = vld [vmem:[#allocation5 + $0x58] sm:$0xff]
    %v51 = vld [vmem:[#allocation5 + $0x60] sm:$0xff]
    %v52 = vld [vmem:[#allocation5 + $0x68] sm:$0xff]
    %v53 = vld [vmem:[#allocation5 + $0x70] sm:$0xff]
    %v54 = vld [vmem:[#allocation5 + $0x78] sm:$0xff]
    %v55 = vld [vmem:[#allocation5 + $0x80] sm:$0xff]
    %v56 = vld [vmem:[#allocation5 + $0x88] sm:$0xff]
    %v57 = vld [vmem:[#allocation5 + $0x90] sm:$0xff]
    %v58 = vld [vmem:[#allocation5 + $0x98] sm:$0xff]
    %v59 = vld [vmem:[#allocation5 + $0xa0] sm:$0xff]
    %v60 = vld [vmem:[#allocation5 + $0xa8] sm:$0xff]
    %v61 = vld [vmem:[#allocation5 + $0xb0] sm:$0xff]
    %v62 = vld [vmem:[#allocation5 + $0xb8] sm:$0xff]
    %v63 = vld [vmem:[#allocation5 + $0xc0] sm:$0xff]
    %v64 = vld [vmem:[#allocation5 + $0xc8] sm:$0xff]
    %v65 = vld [vmem:[#allocation5 + $0xd0] sm:$0xff]
    %v66 = vld [vmem:[#allocation5 + $0xd8] sm:$0xff]
    %v67 = vld [vmem:[#allocation5 + $0xe0] sm:$0xff]
    %v68 = vld [vmem:[#allocation5 + $0xe8] sm:$0xff]
    %v69 = vld [vmem:[#allocation5 + $0xf0] sm:$0xff]
    %v70 = vld [vmem:[#allocation5 + $0xf8] sm:$0xff]
    %v71 = vld [vmem:[#allocation5 + $0x100] sm:$0xff]
    %v72 = vld [vmem:[#allocation5 + $0x108] sm:$0xff]
    %v73 = vld [vmem:[#allocation5 + $0x110] sm:$0xff]
    %v74 = vld [vmem:[#allocation5 + $0x118] sm:$0xff]
    %v75 = vld [vmem:[#allocation5 + $0x120] sm:$0xff]
    %v76 = vld [vmem:[#allocation5 + $0x128] sm:$0xff]
    %v77 = vld [vmem:[#allocation5 + $0x130] sm:$0xff]
    %v78 = vld [vmem:[#allocation5 + $0x138] sm:$0xff]
    %v79 = vld [vmem:[#allocation5 + $0x140] sm:$0xff]
    %v80 = vld [vmem:[#allocation5 + $0x148] sm:$0xff]
    %v81 = vld [vmem:[#allocation5 + $0x150] sm:$0xff]
    %v82 = vld [vmem:[#allocation5 + $0x158] sm:$0xff]
    %v83 = vld [vmem:[#allocation5 + $0x160] sm:$0xff]
    %v84 = vld [vmem:[#allocation5 + $0x168] sm:$0xff]
    %v85 = vld [vmem:[#allocation5 + $0x170] sm:$0xff]
    %v86 = vld [vmem:[#allocation5 + $0x178] sm:$0xff]
    %v87 = vld [vmem:[#allocation5 + $0x180] sm:$0xff]
    %v88 = vld [vmem:[#allocation5 + $0x188] sm:$0xff]
    %v89 = vld [vmem:[#allocation5 + $0x190] sm:$0xff]
    %v90 = vld [vmem:[#allocation5 + $0x198] sm:$0xff]
    %v91 = vld [vmem:[#allocation5 + $0x1a0] sm:$0xff]
    %v92 = vld [vmem:[#allocation5 + $0x1a8] sm:$0xff]
    %v93 = vld [vmem:[#allocation5 + $0x1b0] sm:$0xff]
    %v94 = vld [vmem:[#allocation5 + $0x1b8] sm:$0xff]
    %v95 = vld [vmem:[#allocation5 + $0x1c0] sm:$0xff]
    %v96 = vld [vmem:[#allocation5 + $0x1c8] sm:$0xff]
    %v97 = vld [vmem:[#allocation5 + $0x1d0] sm:$0xff]
    %v98 = vld [vmem:[#allocation5 + $0x1d8] sm:$0xff]
    %v99 = vld [vmem:[#allocation5 + $0x1e0] sm:$0xff]
    %v100 = vld [vmem:[#allocation5 + $0x1e8] sm:$0xff]
    %v101 = vld [vmem:[#allocation5 + $0x1f0] sm:$0xff]
    %v102 = vld [vmem:[#allocation5 + $0x1f8] sm:$0xff]
    %v104 = vlaneseq
    %v105 = vshrl.u32 %v104, 7
    %v106 = vsub.s32 0, %v105
    %v107 = vrot.slane %v38, %v106
    %v108 = vlaneseq
    %v109 = vshrl.u32 %v108, 7
    %v110 = vsub.s32 1, %v109
    %v111 = vrot.slane %v38, %v110
    %v112 = vlaneseq
    %v113 = vshrl.u32 %v112, 7
    %v114 = vsub.s32 2, %v113
    %v115 = vrot.slane %v38, %v114
    %v116 = vlaneseq
    %v117 = vshrl.u32 %v116, 7
    %v118 = vsub.s32 3, %v117
    %v119 = vrot.slane %v38, %v118
    %124 = vmatprep.subr.mxu0 0.0
    %125 = vmatpush1.msra.mxu0 %v39
    %126 = vmatprep.subr.mxu0 0.0
    %127 = vmatpush1.msra.mxu0 %v40
    %128 = vmatprep.subr.mxu0 0.0
    %129 = vmatpush1.msra.mxu0 %v41
    %130 = vmatprep.subr.mxu0 0.0
    %131 = vmatpush1.msra.mxu0 %v42
    %132 = vmatprep.subr.mxu0 0.0
    %133 = vmatpush1.msra.mxu0 %v43
    %134 = vmatprep.subr.mxu0 0.0
    %135 = vmatpush1.msra.mxu0 %v44
    %136 = vmatprep.subr.mxu0 0.0
    %137 = vmatpush1.msra.mxu0 %v45
    %138 = vmatprep.subr.mxu0 0.0
    %139 = vmatpush1.msra.mxu0 %v46
    %140 = vmatprep.subr.mxu0 0.0
    %141 = vmatpush1.msra.mxu0 %v47
    %142 = vmatprep.subr.mxu0 0.0
    %143 = vmatpush1.msra.mxu0 %v48
    %144 = vmatprep.subr.mxu0 0.0
    %145 = vmatpush1.msra.mxu0 %v49
    %146 = vmatprep.subr.mxu0 0.0
    %147 = vmatpush1.msra.mxu0 %v50
    %148 = vmatprep.subr.mxu0 0.0
    %149 = vmatpush1.msra.mxu0 %v51
    %150 = vmatprep.subr.mxu0 0.0
    %151 = vmatpush1.msra.mxu0 %v52
    %152 = vmatprep.subr.mxu0 0.0
    %153 = vmatpush1.msra.mxu0 %v53
    %154 = vmatprep.subr.mxu0 0.0
    %155 = vmatpush1.msra.mxu0 %v54
    %156 = vmatprep.subr.mxu0 0.0
    %157 = vmatpush1.msra.mxu0 %v55
    %158 = vmatprep.subr.mxu0 0.0
    %159 = vmatpush1.msra.mxu0 %v56
    %160 = vmatprep.subr.mxu0 0.0
    %161 = vmatpush1.msra.mxu0 %v57
    %162 = vmatprep.subr.mxu0 0.0
    %163 = vmatpush1.msra.mxu0 %v58
    %164 = vmatprep.subr.mxu0 0.0
    %165 = vmatpush1.msra.mxu0 %v59
    %166 = vmatprep.subr.mxu0 0.0
    %167 = vmatpush1.msra.mxu0 %v60
    %168 = vmatprep.subr.mxu0 0.0
    %169 = vmatpush1.msra.mxu0 %v61
    %170 = vmatprep.subr.mxu0 0.0
    %171 = vmatpush1.msra.mxu0 %v62
    %172 = vmatprep.subr.mxu0 0.0
    %173 = vmatpush1.msra.mxu0 %v63
    %174 = vmatprep.subr.mxu0 0.0
    %175 = vmatpush1.msra.mxu0 %v64
    %176 = vmatprep.subr.mxu0 0.0
    %177 = vmatpush1.msra.mxu0 %v65
    %178 = vmatprep.subr.mxu0 0.0
    %179 = vmatpush1.msra.mxu0 %v66
    %180 = vmatprep.subr.mxu0 0.0
    %181 = vmatpush1.msra.mxu0 %v67
    %182 = vmatprep.subr.mxu0 0.0
    %183 = vmatpush1.msra.mxu0 %v68
    %184 = vmatprep.subr.mxu0 0.0
    %185 = vmatpush1.msra.mxu0 %v69
    %186 = vmatprep.subr.mxu0 0.0
    %187 = vmatpush1.msra.mxu0 %v70
    %188 = vmatprep.mubr.f32.mxu0 %v111
    %189 = vmatmul.mubr.f32.gmra.mrb[0].mxu0 %v107
    %v190 = vpop.f32.mrb[0].mxu0
    %v191 = vadd.f32 0.0, %v190
    %v192 = vpop.f32.mrb[0].mxu0
    %193 = vdwg.mxu0
    %194 = vmatprep.subr.mxu0 0.0
    %195 = vmatpush1.msra.mxu0 %v71
    %196 = vmatprep.subr.mxu0 0.0
    %197 = vmatpush1.msra.mxu0 %v72
    %198 = vmatprep.subr.mxu0 0.0
    %199 = vmatpush1.msra.mxu0 %v73
    %200 = vmatprep.subr.mxu0 0.0
    %201 = vmatpush1.msra.mxu0 %v74
    %202 = vmatprep.subr.mxu0 0.0
    %203 = vmatpush1.msra.mxu0 %v75
    %204 = vmatprep.subr.mxu0 0.0
    %205 = vmatpush1.msra.mxu0 %v76
    %206 = vmatprep.subr.mxu0 0.0
    %207 = vmatpush1.msra.mxu0 %v77
    %208 = vmatprep.subr.mxu0 0.0
    %209 = vmatpush1.msra.mxu0 %v78
    %210 = vmatprep.subr.mxu0 0.0
    %211 = vmatpush1.msra.mxu0 %v79
    %212 = vmatprep.subr.mxu0 0.0
    %213 = vmatpush1.msra.mxu0 %v80
    %214 = vmatprep.subr.mxu0 0.0
    %215 = vmatpush1.msra.mxu0 %v81
    %216 = vmatprep.subr.mxu0 0.0
    %217 = vmatpush1.msra.mxu0 %v82
    %218 = vmatprep.subr.mxu0 0.0
    %219 = vmatpush1.msra.mxu0 %v83
    %220 = vmatprep.subr.mxu0 0.0
    %221 = vmatpush1.msra.mxu0 %v84
    %222 = vmatprep.subr.mxu0 0.0
    %223 = vmatpush1.msra.mxu0 %v85
    %224 = vmatprep.subr.mxu0 0.0
    %225 = vmatpush1.msra.mxu0 %v86
    %226 = vmatprep.subr.mxu0 0.0
    %227 = vmatpush1.msra.mxu0 %v87
    %228 = vmatprep.subr.mxu0 0.0
    %229 = vmatpush1.msra.mxu0 %v88
    %230 = vmatprep.subr.mxu0 0.0
    %231 = vmatpush1.msra.mxu0 %v89
    %232 = vmatprep.subr.mxu0 0.0
    %233 = vmatpush1.msra.mxu0 %v90
    %234 = vmatprep.subr.mxu0 0.0
    %235 = vmatpush1.msra.mxu0 %v91
    %236 = vmatprep.subr.mxu0 0.0
    %237 = vmatpush1.msra.mxu0 %v92
    %238 = vmatprep.subr.mxu0 0.0
    %239 = vmatpush1.msra.mxu0 %v93
    %240 = vmatprep.subr.mxu0 0.0
    %241 = vmatpush1.msra.mxu0 %v94
    %242 = vmatprep.subr.mxu0 0.0
    %243 = vmatpush1.msra.mxu0 %v95
    %244 = vmatprep.subr.mxu0 0.0
    %245 = vmatpush1.msra.mxu0 %v96
    %246 = vmatprep.subr.mxu0 0.0
    %247 = vmatpush1.msra.mxu0 %v97
    %248 = vmatprep.subr.mxu0 0.0
    %249 = vmatpush1.msra.mxu0 %v98
    %250 = vmatprep.subr.mxu0 0.0
    %251 = vmatpush1.msra.mxu0 %v99
    %252 = vmatprep.subr.mxu0 0.0
    %253 = vmatpush1.msra.mxu0 %v100
    %254 = vmatprep.subr.mxu0 0.0
    %255 = vmatpush1.msra.mxu0 %v101
    %256 = vmatprep.subr.mxu0 0.0
    %257 = vmatpush1.msra.mxu0 %v102
    %258 = vmatprep.mubr.f32.mxu0 %v119
    %259 = vmatmul.mubr.f32.gmra.mrb[0].mxu0 %v115
    %v260 = vpop.f32.mrb[0].mxu0
    %v261 = vadd.f32 %v191, %v260
    %v262 = vpop.f32.mrb[0].mxu0
    %263 = vdwg.mxu0
    %264 = vst [vmem:[#allocation7] sm:$0x1] %v261
    // Predicated region
    $region18: #{tpu_custom_call.1} parent=1 // pred_check
      _
    $region19: #{tpu_custom_call.1} parent=1 // pred_check_branch
      %266 = sbr.rel (0) target = $region21
    $region20: #{tpu_custom_call.1} parent=1 // pred_region
      %s268 = ssub.s32 16, 16
      %269 = vsyncadd [#allocation4], %s268
      %s271 = sshll.u32 [#allocation7], 4
      %s272 = int_to_ptr.vmem [resolvable:$true] %s271
      %274 = dma.vmem_to_hbm [thread:$0]  %s272, 16, %s2, [#allocation4]
    $region21: #{tpu_custom_call.1} parent=1 // pred_fallthru
      _
    // Predicated region
    $region22: #{tpu_custom_call.1} parent=1 // pred_check
      _
    $region23: #{tpu_custom_call.1} parent=1 // pred_check_branch
      %276 = sbr.rel (0) target = $region25
    $region24: #{tpu_custom_call.1} parent=1 // pred_region
      %277 = dma.done [#allocation4], 16
    $region25: #{tpu_custom_call.1} parent=1 // pred_fallthru
      _
    %278 = vsyncpa [#allocation3], 1
    %279 = vsyncpa [#allocation6], 1
    %280 = vsyncpa [#allocation4], 1

</llo_original>
